<compile_context>
chip_gen: v5e
topology: v5e:2x2
jax: 0.10.0
libtpu: 0.0.40
codegen_flags: <defaults>
</compile_context>

<pallas_src>
import functools
import math

import jax
import jax.numpy as jnp
from jax.experimental import pallas as pl
from jax.experimental.pallas import tpu as pltpu


_NBUF = 8  # outstanding row DMAs per token tile (semaphore ring depth)


def _embed_gather_kernel(ids_ref, table_hbm, out_ref, sem, *, scale, tile):
    # ids_ref:   (n_pad,) int32, SMEM (scalar-prefetched token ids)
    # table_hbm: (vocab, d_model) f32, HBM resident (memory_space=pl.ANY)
    # out_ref:   (tile, d_model) f32, VMEM output tile for this grid step
    # sem:       (NBUF,) DMA semaphores
    i = pl.program_id(0)
    base = i * tile

    def row_dma(r):
        # Rebuild the exact same descriptor for start() and wait() (same
        # src row, same dst row, same semaphore slot).
        tok = ids_ref[base + r]
        return pltpu.make_async_copy(
            table_hbm.at[tok],            # (d_model,) HBM row
            out_ref.at[r],                # (d_model,) VMEM row, written in place
            sem.at[r & (_NBUF - 1)],
        )

    # Prime the DMA ring with the first NBUF rows.
    @pl.loop(0, _NBUF)
    def _(r):
        row_dma(r).start()

    # Steady state: wait for row r, then immediately reuse its semaphore slot
    # to issue row r + NBUF (keeps NBUF copies in flight).
    @pl.loop(0, tile)
    def _(r):
        row_dma(r).wait()

        @pl.when(r + _NBUF < tile)
        def _():
            row_dma(r + _NBUF).start()

    # All rows have landed in the output VMEM tile; apply sqrt(d_model) in one
    # f32 vector pass before the pipelined HBM writeback.
    out_ref[...] = out_ref[...] * jnp.float32(scale)


def embeddings_forward(x, table, *, tile=256):
    """x: int (B, S) token ids; table: float32 (vocab, d_model).

    Returns (B, S, d_model) float32 == table[x] * sqrt(d_model).
    """
    assert tile % 8 == 0, "tile must be a multiple of 8 (sublane constraint)"
    assert tile >= _NBUF, "tile must be >= DMA ring depth"
    B, S = x.shape
    vocab, d_model = table.shape
    n = B * S
    n_pad = pl.cdiv(n, tile) * tile

    # Clamp ids so no row DMA can go out of bounds (nn.Embedding would raise).
    ids_flat = jnp.clip(x.reshape(n).astype(jnp.int32), 0, vocab - 1)
    if n_pad != n:
        # Padded ids gather row 0; padded output rows are sliced off below.
        # (Prefer choosing tile | B*S to avoid this extra output pass.)
        ids_flat = jnp.pad(ids_flat, (0, n_pad - n))

    scale = math.sqrt(d_model)
    kernel = functools.partial(_embed_gather_kernel, scale=scale, tile=tile)

    out_flat = pl.pallas_call(
        kernel,
        out_shape=jax.ShapeDtypeStruct((n_pad, d_model), table.dtype),
        grid_spec=pltpu.PrefetchScalarGridSpec(
            num_scalar_prefetch=1,                       # ids -> SMEM
            grid=(n_pad // tile,),
            in_specs=[
                # Embedding table stays in HBM; rows are gathered manually.
                pl.BlockSpec(memory_space=pl.ANY),
            ],
            out_specs=pl.BlockSpec((tile, d_model), lambda i, ids: (i, 0)),
            scratch_shapes=[pltpu.SemaphoreType.DMA((_NBUF,))],
        ),
        compiler_params=pltpu.CompilerParams(
            dimension_semantics=("parallel",),           # token tiles shard across TCs
            vmem_limit_bytes=32 * 1024 * 1024,           # tiny footprint, v7x-safe
        ),
    )(ids_flat, table)

    out = out_flat[:n] if n_pad != n else out_flat
    return out.reshape(B, S, d_model)


if __name__ == "__main__":
    # Small shapes; B*S = 512 divides tile=256 exactly -> 2 grid steps, no pad.
    B, S = 2, 256
    vocab, d_model = 512, 128

    key = jax.random.PRNGKey(0)
    k_ids, k_tab = jax.random.split(key)

    x = jax.random.randint(k_ids, (B, S), 0, vocab, dtype=jnp.int32)
    # nn.Embedding default init ~ N(0, 1)
    table = jax.random.normal(k_tab, (vocab, d_model), dtype=jnp.float32)

    out = embeddings_forward(x, table, tile=256)
    out = jax.block_until_ready(out)

    # correctness check against plain-JAX reference
    ref = table[x] * math.sqrt(d_model)
    assert out.shape == (B, S, d_model)
    assert jnp.allclose(out, ref, atol=1e-5, rtol=1e-6), \
        float(jnp.max(jnp.abs(out - ref)))

    print("KERNEL_OK")
</pallas_src>

<mosaic_0001>
module attributes {stable_mosaic.version = 11 : i64} {
  func.func @_embed_gather_kernel(%arg0: i32, %arg1: memref<512xi32, #tpu.memory_space<smem>>, %arg2: memref<512x128xf32, #tpu.memory_space<any>>, %arg3: memref<256x128xf32, #tpu.memory_space<vmem>>, %arg4: memref<8x!tpu.dma_semaphore, #tpu.memory_space<semaphore_mem>>) attributes {dimension_semantics = [#tpu.dimension_semantics<parallel>], iteration_bounds = array<i64: 2>, scalar_prefetch = 1 : i64, scratch_operands = 1 : i64, tpu.core_type = #tpu.core_type<tc>, window_params = [{}, {transform_indices = @transform_1, window_bounds = array<i64: 256, 128>}]} {
    %c256_i32 = arith.constant 256 : i32
    %0 = arith.muli %arg0, %c256_i32 : i32
    %c0_i32 = arith.constant 0 : i32
    %c8_i32 = arith.constant 8 : i32
    %1 = arith.addi %c0_i32, %c8_i32 : i32
    %c1_i32 = arith.constant 1 : i32
    scf.for %arg5 = %c0_i32 to %1 step %c1_i32  : i32 {
      %c1_i32_8 = arith.constant 1 : i32
      %7 = arith.muli %arg5, %c1_i32_8 : i32
      %c0_i32_9 = arith.constant 0 : i32
      %8 = arith.addi %c0_i32_9, %7 : i32
      %9 = arith.addi %0, %8 : i32
      %10 = arith.index_cast %9 : i32 to index
      %11 = memref.load %arg1[%10] : memref<512xi32, #tpu.memory_space<smem>>
      %c7_i32 = arith.constant 7 : i32
      %12 = arith.andi %8, %c7_i32 : i32
      %c0_i32_10 = arith.constant 0 : i32
      %13 = tpu.memref_slice %arg2[%11, %c0_i32_10] : memref<512x128xf32, #tpu.memory_space<any>> -> memref<1x128xf32, #tpu.memory_space<any>>
      %14 = tpu.memref_squeeze %13 : memref<1x128xf32, #tpu.memory_space<any>> -> memref<128xf32, #tpu.memory_space<any>>
      %c0_i32_11 = arith.constant 0 : i32
      %15 = tpu.memref_slice %arg3[%8, %c0_i32_11] : memref<256x128xf32, #tpu.memory_space<vmem>> -> memref<1x128xf32, #tpu.memory_space<vmem>>
      %16 = tpu.memref_squeeze %15 : memref<1x128xf32, #tpu.memory_space<vmem>> -> memref<128xf32, #tpu.memory_space<vmem>>
      %17 = tpu.memref_slice %arg4[%12] : memref<8x!tpu.dma_semaphore, #tpu.memory_space<semaphore_mem>> -> memref<1x!tpu.dma_semaphore, #tpu.memory_space<semaphore_mem>>
      %18 = tpu.memref_squeeze %17 : memref<1x!tpu.dma_semaphore, #tpu.memory_space<semaphore_mem>> -> memref<!tpu.dma_semaphore, #tpu.memory_space<semaphore_mem>>
      tpu.enqueue_dma source(%14 : memref<128xf32, #tpu.memory_space<any>>) target(%16 : memref<128xf32, #tpu.memory_space<vmem>>) target_semaphore(%18 : memref<!tpu.dma_semaphore, #tpu.memory_space<semaphore_mem>>)
    }
    %c8_i32_0 = arith.constant 8 : i32
    %c0_i32_1 = arith.constant 0 : i32
    %c256_i32_2 = arith.constant 256 : i32
    %2 = arith.addi %c0_i32_1, %c256_i32_2 : i32
    %c1_i32_3 = arith.constant 1 : i32
    scf.for %arg5 = %c0_i32_1 to %2 step %c1_i32_3  : i32 {
      %c1_i32_8 = arith.constant 1 : i32
      %7 = arith.muli %arg5, %c1_i32_8 : i32
      %c0_i32_9 = arith.constant 0 : i32
      %8 = arith.addi %c0_i32_9, %7 : i32
      %9 = arith.addi %0, %8 : i32
      %10 = arith.index_cast %9 : i32 to index
      %11 = memref.load %arg1[%10] : memref<512xi32, #tpu.memory_space<smem>>
      %c7_i32 = arith.constant 7 : i32
      %12 = arith.andi %8, %c7_i32 : i32
      %c0_i32_10 = arith.constant 0 : i32
      %13 = tpu.memref_slice %arg2[%11, %c0_i32_10] : memref<512x128xf32, #tpu.memory_space<any>> -> memref<1x128xf32, #tpu.memory_space<any>>
      %14 = tpu.memref_squeeze %13 : memref<1x128xf32, #tpu.memory_space<any>> -> memref<128xf32, #tpu.memory_space<any>>
      %c0_i32_11 = arith.constant 0 : i32
      %15 = tpu.memref_slice %arg3[%8, %c0_i32_11] : memref<256x128xf32, #tpu.memory_space<vmem>> -> memref<1x128xf32, #tpu.memory_space<vmem>>
      %16 = tpu.memref_squeeze %15 : memref<1x128xf32, #tpu.memory_space<vmem>> -> memref<128xf32, #tpu.memory_space<vmem>>
      %17 = tpu.memref_slice %arg4[%12] : memref<8x!tpu.dma_semaphore, #tpu.memory_space<semaphore_mem>> -> memref<1x!tpu.dma_semaphore, #tpu.memory_space<semaphore_mem>>
      %18 = tpu.memref_squeeze %17 : memref<1x!tpu.dma_semaphore, #tpu.memory_space<semaphore_mem>> -> memref<!tpu.dma_semaphore, #tpu.memory_space<semaphore_mem>>
      tpu.wait_dma2 semaphore(%18 : memref<!tpu.dma_semaphore, #tpu.memory_space<semaphore_mem>>) src(%14 : memref<128xf32, #tpu.memory_space<any>>) dst(%16 : memref<128xf32, #tpu.memory_space<vmem>>)
      %c8_i32_12 = arith.constant 8 : i32
      %19 = arith.addi %8, %c8_i32_12 : i32
      %c256_i32_13 = arith.constant 256 : i32
      %20 = arith.cmpi slt, %19, %c256_i32_13 : i32
      %21 = arith.extui %20 : i1 to i32
      %c0_i32_14 = arith.constant 0 : i32
      %22 = arith.cmpi ne, %21, %c0_i32_14 : i32
      scf.if %22 {
        %c8_i32_15 = arith.constant 8 : i32
        %23 = arith.addi %8, %c8_i32_15 : i32
        %24 = arith.addi %0, %23 : i32
        %25 = arith.index_cast %24 : i32 to index
        %26 = memref.load %arg1[%25] : memref<512xi32, #tpu.memory_space<smem>>
        %c7_i32_16 = arith.constant 7 : i32
        %27 = arith.andi %23, %c7_i32_16 : i32
        %c0_i32_17 = arith.constant 0 : i32
        %28 = tpu.memref_slice %arg2[%26, %c0_i32_17] : memref<512x128xf32, #tpu.memory_space<any>> -> memref<1x128xf32, #tpu.memory_space<any>>
        %29 = tpu.memref_squeeze %28 : memref<1x128xf32, #tpu.memory_space<any>> -> memref<128xf32, #tpu.memory_space<any>>
        %c0_i32_18 = arith.constant 0 : i32
        %30 = tpu.memref_slice %arg3[%23, %c0_i32_18] : memref<256x128xf32, #tpu.memory_space<vmem>> -> memref<1x128xf32, #tpu.memory_space<vmem>>
        %31 = tpu.memref_squeeze %30 : memref<1x128xf32, #tpu.memory_space<vmem>> -> memref<128xf32, #tpu.memory_space<vmem>>
        %32 = tpu.memref_slice %arg4[%27] : memref<8x!tpu.dma_semaphore, #tpu.memory_space<semaphore_mem>> -> memref<1x!tpu.dma_semaphore, #tpu.memory_space<semaphore_mem>>
        %33 = tpu.memref_squeeze %32 : memref<1x!tpu.dma_semaphore, #tpu.memory_space<semaphore_mem>> -> memref<!tpu.dma_semaphore, #tpu.memory_space<semaphore_mem>>
        tpu.enqueue_dma source(%29 : memref<128xf32, #tpu.memory_space<any>>) target(%31 : memref<128xf32, #tpu.memory_space<vmem>>) target_semaphore(%33 : memref<!tpu.dma_semaphore, #tpu.memory_space<semaphore_mem>>)
      } else {
      }
    }
    %c256_i32_4 = arith.constant 256 : i32
    %c0 = arith.constant 0 : index
    %c0_5 = arith.constant 0 : index
    %3 = vector.load %arg3[%c0, %c0_5] : memref<256x128xf32, #tpu.memory_space<vmem>>, vector<256x128xf32>
    %cst = arith.constant 11.3137083 : f32
    %4 = vector.broadcast %cst : f32 to vector<256x128xf32>
    %5 = arith.mulf %3, %4 : vector<256x128xf32>
    %c0_6 = arith.constant 0 : index
    %c0_7 = arith.constant 0 : index
    %6 = vector.load %arg3[%c0_6, %c0_7] : memref<256x128xf32, #tpu.memory_space<vmem>>, vector<256x128xf32>
    tpu.vector_store %arg3[%c0_6, %c0_7], %5 {strides = array<i32>} : memref<256x128xf32, #tpu.memory_space<vmem>>, vector<256x128xf32>,
    return
  }
  func.func @transform_1(%arg0: i32, %arg1: memref<512xi32, #tpu.memory_space<smem>>) -> (i32, i32) {
    %c0_i32 = arith.constant 0 : i32
    %c0_i32_0 = arith.constant 0 : i32
    return %arg0, %c0_i32 : i32, i32
  }
}

</mosaic_0001>

<llo_original>
// kernel: tpu_custom_call.1
$region0: #{tpu_custom_call.1}
  #allocation0 [shape = 'u32[]', space=smem, size = 0x4, offset = 0x4, fixed_abs, tag = 'smem constant byte address 0x4 - core index']
  #allocation1 [shape = 'u32[72,128]{1,0:T(1,128)}', space=vmem, size = 0x9000, scoped, tag = 'internal scratch']
  #allocation2 [shape = 's32[8]{0}', space=sflag, size = 0x20, scoped, tag = 'scratch operand']
  #allocation3 [shape = 's32[1]{0}', space=sflag, size = 0x4, scoped, tag = 'scoped memory for tpu_custom_call.1']
  #allocation4 [shape = 'u8[2048]{0}', space=smem, size = 0x800, scoped, tag = 'prefetched SMEM operand 0']
  #allocation7 [shape = 's32[]', space=sflag, size = 0x4, offset = 0, fixed_abs, tag = 'sflag constant byte address 0x0 - dummy sync flag']
  #allocation8 [shape = 's32[]', space=sflag, size = 0x4, offset = 0, fixed_abs, tag = 'sflag constant byte address 0x0 - dummy sync flag']
  #allocation9 [shape = 'u32[]', space=smem, size = 0x4, offset = 0x44, fixed_abs, tag = 'smem constant byte address 0x44 - assertion arg 0']
  #allocation10 [shape = 'u32[]', space=smem, size = 0x4, offset = 0x48, fixed_abs, tag = 'smem constant byte address 0x48 - assertion arg 1']
  #allocation11 [shape = 's32[]', space=sflag, size = 0x4, offset = 0, fixed_abs, tag = 'sflag constant byte address 0x0 - dummy sync flag']
  #allocation12 [shape = 's32[]', space=sflag, size = 0x4, offset = 0, fixed_abs, tag = 'sflag constant byte address 0x0 - dummy sync flag']
  %s0 = inlined_call_operand.hbm [shape: s32[512], index: 0, kind: input, shape index: {}]
  %s1 = inlined_call_operand.hbm [shape: f32[512,128], index: 1, kind: input, shape index: {}]
  %s2 = inlined_call_operand.hbm [shape: f32[512,128], index: 2, kind: output, shape index: {}]
  %s3 = sld [smem:[#allocation0]]
  $region51: #{tpu_custom_call.1} parent=0
    _
  %s5 = ssub.s32 1, %s3
  %s6 = scalar_select 0, %s5, %s3
  %s8 = sshll.u32 %s0, 4
  %s9 = int_to_ptr.hbm [resolvable:$true] %s8
  %11 = dma.hbm_to_smem %s9, 64, [#allocation4], [#allocation3]
  %13 = dma.done [#allocation3], 64
  %14 = sfence
  $region1: #{tpu_custom_call.1} parent=0
    #allocation5 [shape = 'u8[262144]{0}', space=vmem, size = 0x40000, scoped, tag = 'output window, operand 0']
    #allocation6 [shape = 's32[2]{0}', space=sflag, size = 0x8, scoped, tag = 'scoped memory for tpu_custom_call.1']
    %15 = vsyncpa [#allocation6], 0
    %s16 = scalar_lea.sflag [#allocation6], 1
    %17 = vsyncpa %s16, 0
    loop: start=0, step=1, limit=3
    $region2: #{tpu_custom_call.1} parent=1 // loop_pre_header
      _
    $region3: #{tpu_custom_call.1} parent=1 // loop_header
      %s19 = sphi 0, %s23
      %p20 = scmp.ge.s32.totalorder %s19, 3
      %s28 = sphi 0, %s30
      %s31 = sphi 0, %s28
      %s41 = sphi 0, %s31
    $region4: #{tpu_custom_call.1} parent=1 // loop_header_branch
      %22 = sbr.rel (%p20) target = $region8
    $region5: #{tpu_custom_call.1} parent=1 // loop_body
      %s24 = ssub.s32 %s19, 1
      %s25 = sadd.s32 %s19, 1
      %s26 = ssub.s32 %s19, %s25
      %p27 = scmp.eq.s32.totalorder %s26, 0
      %s29 = sadd.s32 %s28, 1
      %s30 = scalar_select %p27, %s28, %s29
      %p32 = pneg %p27
      %p33 = scmp.eq.s32.totalorder %s19, 1
      %p34 = por %p32, %p33
      %p35 = scmp.ne.s32.totalorder %s28, %s31
      %p36 = scmp.eq.s32.totalorder %s19, 0
      %p37 = por %p35, %p36
      %p38 = scmp.ne.s32.totalorder %s28, %s31
      %p39 = scmp.eq.s32.totalorder %s24, 1
      %p40 = por %p38, %p39
      %p42 = scmp.ne.s32.totalorder %s31, %s41
      %p43 = scmp.eq.s32.totalorder %s24, 0
      %p44 = por %p42, %p43
      %p45 = scmp.lt.s32.totalorder %s19, 2
      // Predicated region
      $region9: #{tpu_custom_call.1} parent=5 // pred_check
        %p46 = pneg %p45
      $region10: #{tpu_custom_call.1} parent=5 // pred_check_branch
        %48 = sbr.rel (%p46) target = $region12
      $region11: #{tpu_custom_call.1} parent=5 // pred_region
        %p49 = pneg %p37
        %p50 = pneg %p34
        %s51 = sand.u32 %s28, 1
        %s52 = scalar_lea.sflag [#allocation6], %s51
        %s53 = sand.u32 %s28, 1
        %s54 = smul.addr %s53, 256
        %s55 = scalar_lea.vmem [#allocation5], %s54
        %s56 = smul.u32 32, %s19
        %s57 = smul.u32 %s19, 256
        loop: start=0, step=1, limit=8
        $region13: #{tpu_custom_call.1} parent=11 // loop_pre_header
          _
        $region14: #{tpu_custom_call.1} parent=11 // loop_header
          %s59 = sphi 0, %s63
          %p60 = scmp.ge.s32.totalorder %s59, 8
        $region15: #{tpu_custom_call.1} parent=11 // loop_header_branch
          %62 = sbr.rel (%p60) target = $region19
        $region16: #{tpu_custom_call.1} parent=11 // loop_body
          %s64 = sadd.s32 %s57, %s59
          %s65 = sld [smem:[#allocation4 + %s64]]
          %s66 = sand.u32 %s59, 7
          %s67 = scalar_lea.hbm %s1, %s65
          %s68 = scalar_lea.vmem %s55, %s59 [#allocation5]
          %s69 = scalar_lea.sflag [#allocation2], %s66
          // Predicated region
          $region20: #{tpu_custom_call.1} parent=16 // pred_check
            _
          $region21: #{tpu_custom_call.1} parent=16 // pred_check_branch
            %71 = sbr.rel target = $region23
          $region22: #{tpu_custom_call.1} parent=16 // pred_region
            %72 = sst [smem:[#allocation9]] [#allocation8]
            %73 = sst [smem:[#allocation10]] [#allocation7]
          $region23: #{tpu_custom_call.1} parent=16 // pred_fallthru
            _
          %75 = shalt.err (0)
          %s77 = sshll.u32 %s67, 4
          %s78 = int_to_ptr.hbm [resolvable:$true] %s77
          %s79 = sshll.u32 %s68, 4
          %s80 = int_to_ptr.vmem [resolvable:$true] %s79
          %82 = dma.hbm_to_vmem [thread:$0]  %s78, 16, %s80, %s69
        $region17: #{tpu_custom_call.1} parent=11 // loop_footer
          %s63 = sadd.s32 1, %s59
        $region18: #{tpu_custom_call.1} parent=11 // loop_footer_branch
          %58 = sbr.rel target = $region14
        $region19: #{tpu_custom_call.1} parent=11 // loop_exit
          _
        loop: start=0, step=1, limit=256
        $region24: #{tpu_custom_call.1} parent=11 // loop_pre_header
          _
        $region25: #{tpu_custom_call.1} parent=11 // loop_header
          %s84 = sphi 0, %s88
          %p85 = scmp.ge.s32.totalorder %s84, 256
        $region26: #{tpu_custom_call.1} parent=11 // loop_header_branch
          %87 = sbr.rel (%p85) target = $region30
        $region27: #{tpu_custom_call.1} parent=11 // loop_body
          %s89 = sadd.s32 %s57, %s84
          %s90 = sld [smem:[#allocation4 + %s89]]
          %s91 = sand.u32 %s84, 7
          %s92 = scalar_lea.sflag [#allocation2], %s91
          %94 = dma.done %s92, 16
          %s95 = sadd.s32 %s84, 8
          %p96 = scmp.lt.s32.totalorder %s95, 256
          // Predicated region
          $region31: #{tpu_custom_call.1} parent=27 // pred_check
            %p97 = pneg %p96
          $region32: #{tpu_custom_call.1} parent=27 // pred_check_branch
            %99 = sbr.rel (%p97) target = $region34
          $region33: #{tpu_custom_call.1} parent=27 // pred_region
            %s100 = sadd.s32 %s57, %s95
            %s101 = sld [smem:[#allocation4 + %s100]]
            %s102 = sand.u32 %s95, 7
            %s103 = scalar_lea.hbm %s1, %s101
            %s104 = scalar_lea.vmem %s55, %s95 [#allocation5]
            %s105 = scalar_lea.sflag [#allocation2], %s102
            // Predicated region
            $region35: #{tpu_custom_call.1} parent=33 // pred_check
              _
            $region36: #{tpu_custom_call.1} parent=33 // pred_check_branch
              %107 = sbr.rel target = $region38
            $region37: #{tpu_custom_call.1} parent=33 // pred_region
              %108 = sst [smem:[#allocation9]] [#allocation12]
              %109 = sst [smem:[#allocation10]] [#allocation11]
            $region38: #{tpu_custom_call.1} parent=33 // pred_fallthru
              _
            %111 = shalt.err (0)
            %s113 = sshll.u32 %s103, 4
            %s114 = int_to_ptr.hbm [resolvable:$true] %s113
            %s115 = sshll.u32 %s104, 4
            %s116 = int_to_ptr.vmem [resolvable:$true] %s115
            %118 = dma.hbm_to_vmem [thread:$0]  %s114, 16, %s116, %s105
          $region34: #{tpu_custom_call.1} parent=27 // pred_fallthru
            _
        $region28: #{tpu_custom_call.1} parent=11 // loop_footer
          %s88 = sadd.s32 1, %s84
        $region29: #{tpu_custom_call.1} parent=11 // loop_footer_branch
          %83 = sbr.rel target = $region25
        $region30: #{tpu_custom_call.1} parent=11 // loop_exit
          _
        %v119 = vld [vmem:[%s55] sm:$0xff]
        %v120 = vld [vmem:[%s55 + $0x8] sm:$0xff]
        %v121 = vld [vmem:[%s55 + $0x10] sm:$0xff]
        %v122 = vld [vmem:[%s55 + $0x18] sm:$0xff]
        %v123 = vld [vmem:[%s55 + $0x20] sm:$0xff]
        %v124 = vld [vmem:[%s55 + $0x28] sm:$0xff]
        %v125 = vld [vmem:[%s55 + $0x30] sm:$0xff]
        %v126 = vld [vmem:[%s55 + $0x38] sm:$0xff]
        %v127 = vld [vmem:[%s55 + $0x40] sm:$0xff]
        %v128 = vld [vmem:[%s55 + $0x48] sm:$0xff]
        %v129 = vld [vmem:[%s55 + $0x50] sm:$0xff]
        %v130 = vld [vmem:[%s55 + $0x58] sm:$0xff]
        %v131 = vld [vmem:[%s55 + $0x60] sm:$0xff]
        %v132 = vld [vmem:[%s55 + $0x68] sm:$0xff]
        %v133 = vld [vmem:[%s55 + $0x70] sm:$0xff]
        %v134 = vld [vmem:[%s55 + $0x78] sm:$0xff]
        %v135 = vld [vmem:[%s55 + $0x80] sm:$0xff]
        %v136 = vld [vmem:[%s55 + $0x88] sm:$0xff]
        %v137 = vld [vmem:[%s55 + $0x90] sm:$0xff]
        %v138 = vld [vmem:[%s55 + $0x98] sm:$0xff]
        %v139 = vld [vmem:[%s55 + $0xa0] sm:$0xff]
        %v140 = vld [vmem:[%s55 + $0xa8] sm:$0xff]
        %v141 = vld [vmem:[%s55 + $0xb0] sm:$0xff]
        %v142 = vld [vmem:[%s55 + $0xb8] sm:$0xff]
        %v143 = vld [vmem:[%s55 + $0xc0] sm:$0xff]
        %v144 = vld [vmem:[%s55 + $0xc8] sm:$0xff]
        %v145 = vld [vmem:[%s55 + $0xd0] sm:$0xff]
        %v146 = vld [vmem:[%s55 + $0xd8] sm:$0xff]
        %v147 = vld [vmem:[%s55 + $0xe0] sm:$0xff]
        %v148 = vld [vmem:[%s55 + $0xe8] sm:$0xff]
        %v149 = vld [vmem:[%s55 + $0xf0] sm:$0xff]
        %v150 = vld [vmem:[%s55 + $0xf8] sm:$0xff]
        %v151 = vmul.f32 %v119, 11.313708
        %v152 = vmul.f32 %v120, 11.313708
        %v153 = vmul.f32 %v121, 11.313708
        %v154 = vmul.f32 %v122, 11.313708
        %v155 = vmul.f32 %v123, 11.313708
        %v156 = vmul.f32 %v124, 11.313708
        %v157 = vmul.f32 %v125, 11.313708
        %v158 = vmul.f32 %v126, 11.313708
        %v159 = vmul.f32 %v127, 11.313708
        %v160 = vmul.f32 %v128, 11.313708
        %v161 = vmul.f32 %v129, 11.313708
        %v162 = vmul.f32 %v130, 11.313708
        %v163 = vmul.f32 %v131, 11.313708
        %v164 = vmul.f32 %v132, 11.313708
        %v165 = vmul.f32 %v133, 11.313708
        %v166 = vmul.f32 %v134, 11.313708
        %v167 = vmul.f32 %v135, 11.313708
        %v168 = vmul.f32 %v136, 11.313708
        %v169 = vmul.f32 %v137, 11.313708
        %v170 = vmul.f32 %v138, 11.313708
        %v171 = vmul.f32 %v139, 11.313708
        %v172 = vmul.f32 %v140, 11.313708
        %v173 = vmul.f32 %v141, 11.313708
        %v174 = vmul.f32 %v142, 11.313708
        %v175 = vmul.f32 %v143, 11.313708
        %v176 = vmul.f32 %v144, 11.313708
        %v177 = vmul.f32 %v145, 11.313708
        %v178 = vmul.f32 %v146, 11.313708
        %v179 = vmul.f32 %v147, 11.313708
        %v180 = vmul.f32 %v148, 11.313708
        %v181 = vmul.f32 %v149, 11.313708
        %v182 = vmul.f32 %v150, 11.313708
        %183 = vst [vmem:[%s55] sm:$0xff] %v151
        %184 = vst [vmem:[%s55 + $0x8] sm:$0xff] %v152
        %185 = vst [vmem:[%s55 + $0x10] sm:$0xff] %v153
        %186 = vst [vmem:[%s55 + $0x18] sm:$0xff] %v154
        %187 = vst [vmem:[%s55 + $0x20] sm:$0xff] %v155
        %188 = vst [vmem:[%s55 + $0x28] sm:$0xff] %v156
        %189 = vst [vmem:[%s55 + $0x30] sm:$0xff] %v157
        %190 = vst [vmem:[%s55 + $0x38] sm:$0xff] %v158
        %191 = vst [vmem:[%s55 + $0x40] sm:$0xff] %v159
        %192 = vst [vmem:[%s55 + $0x48] sm:$0xff] %v160
        %193 = vst [vmem:[%s55 + $0x50] sm:$0xff] %v161
        %194 = vst [vmem:[%s55 + $0x58] sm:$0xff] %v162
        %195 = vst [vmem:[%s55 + $0x60] sm:$0xff] %v163
        %196 = vst [vmem:[%s55 + $0x68] sm:$0xff] %v164
        %197 = vst [vmem:[%s55 + $0x70] sm:$0xff] %v165
        %198 = vst [vmem:[%s55 + $0x78] sm:$0xff] %v166
        %199 = vst [vmem:[%s55 + $0x80] sm:$0xff] %v167
        %200 = vst [vmem:[%s55 + $0x88] sm:$0xff] %v168
        %201 = vst [vmem:[%s55 + $0x90] sm:$0xff] %v169
        %202 = vst [vmem:[%s55 + $0x98] sm:$0xff] %v170
        %203 = vst [vmem:[%s55 + $0xa0] sm:$0xff] %v171
        %204 = vst [vmem:[%s55 + $0xa8] sm:$0xff] %v172
        %205 = vst [vmem:[%s55 + $0xb0] sm:$0xff] %v173
        %206 = vst [vmem:[%s55 + $0xb8] sm:$0xff] %v174
        %207 = vst [vmem:[%s55 + $0xc0] sm:$0xff] %v175
        %208 = vst [vmem:[%s55 + $0xc8] sm:$0xff] %v176
        %209 = vst [vmem:[%s55 + $0xd0] sm:$0xff] %v177
        %210 = vst [vmem:[%s55 + $0xd8] sm:$0xff] %v178
        %211 = vst [vmem:[%s55 + $0xe0] sm:$0xff] %v179
        %212 = vst [vmem:[%s55 + $0xe8] sm:$0xff] %v180
        %213 = vst [vmem:[%s55 + $0xf0] sm:$0xff] %v181
        %214 = vst [vmem:[%s55 + $0xf8] sm:$0xff] %v182
        %s215 = sand.u32 %s28, 1
        %s216 = scalar_lea.sflag [#allocation6], %s215
        %s217 = sand.u32 %s28, 1
        %s218 = smul.addr %s217, 256
        %s219 = scalar_lea.vmem [#allocation5], %s218
        // Predicated region
        $region39: #{tpu_custom_call.1} parent=11 // pred_check
          %p220 = pneg %p34
        $region40: #{tpu_custom_call.1} parent=11 // pred_check_branch
          %222 = sbr.rel (%p220) target = $region42
        $region41: #{tpu_custom_call.1} parent=11 // pred_region
          %s223 = smul.u32 32, %s19
          %225 = vsyncadd %s216, 0
          %s226 = smul.addr %s223, 8
          %s227 = scalar_lea.hbm %s2, %s226
          %s228 = sshll.u32 %s219, 4
          %s229 = int_to_ptr.vmem [resolvable:$true] %s228
          %s230 = sshll.u32 %s227, 4
          %s231 = int_to_ptr.hbm [resolvable:$true] %s230
          %236 = dma.vmem_to_hbm [thread:$0]  %s229, 4096, %s231, %s216, 128, 128, 8
        $region42: #{tpu_custom_call.1} parent=11 // pred_fallthru
          _
      $region12: #{tpu_custom_call.1} parent=5 // pred_fallthru
        _
      %p237 = scmp.le.s32.totalorder 1, %s19
      // Predicated region
      $region43: #{tpu_custom_call.1} parent=5 // pred_check
        %p238 = pneg %p237
      $region44: #{tpu_custom_call.1} parent=5 // pred_check_branch
        %240 = sbr.rel (%p238) target = $region46
      $region45: #{tpu_custom_call.1} parent=5 // pred_region
        %s241 = ssub.s32 %s19, 1
        // Predicated region
        $region47: #{tpu_custom_call.1} parent=45 // pred_check
          %p242 = pneg %p40
        $region48: #{tpu_custom_call.1} parent=45 // pred_check_branch
          %244 = sbr.rel (%p242) target = $region50
        $region49: #{tpu_custom_call.1} parent=45 // pred_region
          %s245 = sand.u32 %s31, 1
          %s246 = scalar_lea.sflag [#allocation6], %s245
          %s247 = sand.u32 %s31, 1
          %s248 = smul.addr %s247, 256
          %s249 = scalar_lea.vmem [#allocation5], %s248
          %251 = dma.done %s246, 4096
        $region50: #{tpu_custom_call.1} parent=45 // pred_fallthru
          _
      $region46: #{tpu_custom_call.1} parent=5 // pred_fallthru
        _
    $region6: #{tpu_custom_call.1} parent=1 // loop_footer
      %s23 = sadd.s32 1, %s19
    $region7: #{tpu_custom_call.1} parent=1 // loop_footer_branch
      %18 = sbr.rel target = $region3
    $region8: #{tpu_custom_call.1} parent=1 // loop_exit
      _
    %252 = vsyncpa [#allocation6], 1
    %s253 = scalar_lea.sflag [#allocation6], 1
    %254 = vsyncpa %s253, 1
  %255 = vsyncmov [#allocation2]
  %s256 = vpop.sfrf %255
  %p257 = scmp.eq.s32.totalorder %s256, 0
  %p258 = pneg %p257
  %260 = shalt.err (%p258)
  %s261 = scalar_lea.sflag [#allocation2], 1
  %262 = vsyncmov %s261
  %s263 = vpop.sfrf %262
  %p264 = scmp.eq.s32.totalorder %s263, 0
  %p265 = pneg %p264
  %267 = shalt.err (%p265)
  %s268 = scalar_lea.sflag [#allocation2], 2
  %269 = vsyncmov %s268
  %s270 = vpop.sfrf %269
  %p271 = scmp.eq.s32.totalorder %s270, 0
  %p272 = pneg %p271
  %274 = shalt.err (%p272)
  %s275 = scalar_lea.sflag [#allocation2], 3
  %276 = vsyncmov %s275
  %s277 = vpop.sfrf %276
  %p278 = scmp.eq.s32.totalorder %s277, 0
  %p279 = pneg %p278
  %281 = shalt.err (%p279)
  %s282 = scalar_lea.sflag [#allocation2], 4
  %283 = vsyncmov %s282
  %s284 = vpop.sfrf %283
  %p285 = scmp.eq.s32.totalorder %s284, 0
  %p286 = pneg %p285
  %288 = shalt.err (%p286)
  %s289 = scalar_lea.sflag [#allocation2], 5
  %290 = vsyncmov %s289
  %s291 = vpop.sfrf %290
  %p292 = scmp.eq.s32.totalorder %s291, 0
  %p293 = pneg %p292
  %295 = shalt.err (%p293)
  %s296 = scalar_lea.sflag [#allocation2], 6
  %297 = vsyncmov %s296
  %s298 = vpop.sfrf %297
  %p299 = scmp.eq.s32.totalorder %s298, 0
  %p300 = pneg %p299
  %302 = shalt.err (%p300)
  %s303 = scalar_lea.sflag [#allocation2], 7
  %304 = vsyncmov %s303
  %s305 = vpop.sfrf %304
  %p306 = scmp.eq.s32.totalorder %s305, 0
  %p307 = pneg %p306
  %309 = shalt.err (%p307)

</llo_original>
